<compile_context>
chip_gen: v7x
topology: tpu7x:2x2x1
jax: 0.10.0
libtpu: 0.0.40
codegen_flags: <defaults>
</compile_context>

<pallas_src>
import functools

import jax
import jax.numpy as jnp
import numpy as np
from jax import lax
from jax.experimental import pallas as pl
from jax.experimental.pallas import tpu as pltpu

LEAKY_SLOPE = 0.01  # nn.LeakyReLU default
BN_EPS = 1e-5


def _leaky(x):
    # max(x, a*x) == LeakyReLU(x) for 0 < a < 1 (single VALU op, no cmp+select)
    return jnp.maximum(x, LEAKY_SLOPE * x)


def tenant_kernel(x_ref, w1r_ref, t1_ref, tr_ref, wg_ref, t2_ref,
                  w3_ref, t3_ref, o_ref, *, seq_len, width):
    """One row-tile of the flattened (N*L, C) problem.

    x_ref   : (TM, Cin)            f32 activations (TM is a multiple of seq_len)
    w1r_ref : (Cin, width + Cout)  bf16 fused [conv1 | resize] 1x1 weights (BN-scaled)
    wg_ref  : (3, width, width)    bf16 per-tap block-diagonal grouped-conv weights
    w3_ref  : (width, Cout)        bf16 1x1 conv weights (BN-scaled)
    t*_ref  : (1, C)               f32 folded BatchNorm shifts
    """
    x = x_ref[...].astype(jnp.bfloat16)   # cast in-kernel; no extra HBM pass
    tm = x.shape[0]

    # --- fused block[0..2] + resize path: single matmul over channels --------
    y = jnp.dot(x, w1r_ref[...], preferred_element_type=jnp.float32)
    y1 = _leaky(y[:, :width] + t1_ref[...])          # Conv1d(k=1) + BN + LeakyReLU
    ident = y[:, width:] + tr_ref[...]               # resize Conv1d(k=1) + BN

    # --- block[3..5]: grouped Conv1d(k=3, pad=1, groups=32) + BN + LeakyReLU -
    # Tap rows are gathered by shifting along the flattened row axis; the
    # (tm, 1) row-position masks implement the zero padding and kill leakage
    # across batch elements / cyclic wraparound (tiles are sequence-aligned).
    pos = lax.broadcasted_iota(jnp.int32, (tm, 1), 0) % seq_len
    y_prev = jnp.where(pos == 0, 0.0,
                       jnp.roll(y1, 1, axis=0)).astype(jnp.bfloat16)            # x[l-1]
    y_next = jnp.where(pos == seq_len - 1, 0.0,
                       jnp.roll(y1, -1, axis=0)).astype(jnp.bfloat16)           # x[l+1]
    y1b = y1.astype(jnp.bfloat16)
    # Three accumulated dots: same MXU FLOPs as one (tm,3W)x(3W,W) matmul but
    # no (tm, 3*width) concat materialization (VMEM / vreg pressure).
    y2 = jnp.dot(y_prev, wg_ref[0], preferred_element_type=jnp.float32)
    y2 = y2 + jnp.dot(y1b, wg_ref[1], preferred_element_type=jnp.float32)
    y2 = y2 + jnp.dot(y_next, wg_ref[2], preferred_element_type=jnp.float32)
    y2 = _leaky(y2 + t2_ref[...])

    # --- block[6..7]: Conv1d(width -> out_dim, k=1) + BN ---------------------
    y3 = jnp.dot(y2.astype(jnp.bfloat16), w3_ref[...],
                 preferred_element_type=jnp.float32) + t3_ref[...]

    # --- residual add + LeakyReLU --------------------------------------------
    o_ref[...] = _leaky(y3 + ident).astype(o_ref.dtype)


def _fold_bn(bias, gamma, beta, mean, var):
    """Fold conv bias + inference-mode BatchNorm into (scale, shift)."""
    scale = gamma / jnp.sqrt(var + BN_EPS)
    shift = beta + (bias - mean) * scale
    return scale[None, :], shift[None, :]


def make_tenant_params(key, in_dim, mid_dim, out_dim):
    """Random module parameters in folded (weight, scale, shift) f32 form."""
    width = mid_dim // 64 * 32 * 4
    groups = 32
    cpg = width // groups
    ks = jax.random.split(key, 24)

    def nrm(k, shape, s=0.1):
        return s * jax.random.normal(k, shape, dtype=jnp.float32)

    # conv1: PyTorch weight (width, in_dim, 1) -> (in_dim, width)
    w1 = nrm(ks[0], (in_dim, width))
    b1 = nrm(ks[1], (width,))
    g1, be1 = 1.0 + nrm(ks[2], (width,)), nrm(ks[3], (width,))
    m1, v1 = nrm(ks[4], (width,)), 1.0 + jnp.abs(nrm(ks[5], (width,)))

    # grouped conv: PyTorch weight (width, width//groups, 3) expanded into a
    # dense block-diagonal (3, width, width) [tap, c_in, c_out] weight.
    # TODO(synk): at large widths (cpg >= 128) keep this compact
    # (3, groups, cpg, cpg) and do a per-group contraction instead of the
    # 32x-inflated dense weight (dominant MXU + VMEM cost under v7x's 64 MiB);
    # dense is kept here because cpg=4 at these shapes would starve the MXU.
    wg_raw = np.asarray(nrm(ks[6], (width, cpg, 3)))
    co = np.arange(width)
    ci = (co // cpg)[None, :] * cpg + np.arange(cpg)[:, None]   # (cpg, width)
    wg = np.zeros((3, width, width), dtype=np.float32)
    for k in range(3):
        wg[k, ci, co[None, :]] = wg_raw[:, :, k].T
    wg = jnp.asarray(wg)
    b2 = nrm(ks[7], (width,))
    g2, be2 = 1.0 + nrm(ks[8], (width,)), nrm(ks[9], (width,))
    m2, v2 = nrm(ks[10], (width,)), 1.0 + jnp.abs(nrm(ks[11], (width,)))

    # conv3: (out_dim, width, 1) -> (width, out_dim)
    w3 = nrm(ks[12], (width, out_dim))
    b3 = nrm(ks[13], (out_dim,))
    g3, be3 = 1.0 + nrm(ks[14], (out_dim,)), nrm(ks[15], (out_dim,))
    m3, v3 = nrm(ks[16], (out_dim,)), 1.0 + jnp.abs(nrm(ks[17], (out_dim,)))

    # resize conv: (out_dim, in_dim, 1) -> (in_dim, out_dim)
    wr = nrm(ks[18], (in_dim, out_dim))
    br = nrm(ks[19], (out_dim,))
    gr, ber = 1.0 + nrm(ks[20], (out_dim,)), nrm(ks[21], (out_dim,))
    mr, vr = nrm(ks[22], (out_dim,)), 1.0 + jnp.abs(nrm(ks[23], (out_dim,)))

    s1, t1 = _fold_bn(b1, g1, be1, m1, v1)
    s2, t2 = _fold_bn(b2, g2, be2, m2, v2)
    s3, t3 = _fold_bn(b3, g3, be3, m3, v3)
    sr, tr = _fold_bn(br, gr, ber, mr, vr)
    return dict(w1=w1, s1=s1, t1=t1, wg=wg, s2=s2, t2=t2,
                w3=w3, s3=s3, t3=t3, wr=wr, sr=sr, tr=tr)


def pack_tenant_params(p):
    """One-time packing: fold BN scales into the conv weights, fuse the two
    1x1 convs (main + resize), keep per-tap weights as (3, W, W), cast to bf16."""
    w1r = jnp.concatenate([p["w1"] * p["s1"], p["wr"] * p["sr"]], axis=1)
    wg2 = p["wg"] * p["s2"]                      # (3, width, width), BN-scaled
    w3s = p["w3"] * p["s3"]
    return dict(
        w1r=w1r.astype(jnp.bfloat16),
        wg2=wg2.astype(jnp.bfloat16),
        w3s=w3s.astype(jnp.bfloat16),
        t1=p["t1"], t2=p["t2"], t3=p["t3"], tr=p["tr"],
    )


def _vmem_capacity_bytes():
    """Physical per-core VMEM; conservative fallback (v7x: 64 MiB) on failure."""
    try:
        return int(pltpu.get_tpu_info().vmem_capacity_bytes)
    except Exception:
        return 64 << 20


def _single_buffer_supported():
    """Probe whether this JAX build accepts pipeline_mode=pl.Buffered(1)."""
    try:
        pl.BlockSpec((8, 128), lambda i: (0, 0), pipeline_mode=pl.Buffered(1))
        return True
    except Exception:
        return False


_SINGLE_BUFFER_WEIGHTS = _single_buffer_supported()


def _pick_batch_tile(n, seq_len, target_rows):
    """Largest sequence-aligned batch-divisor tile within the per-step row
    budget, preferring MXU-friendly (x256/x128) row counts and >=2 grid steps
    (so v7x's two TensorCores both get work)."""
    divs = [d for d in range(1, n + 1) if n % d == 0]
    valid = [d for d in divs if (d * seq_len) % 8 == 0 or d == n]
    fitting = [d for d in valid if d * seq_len <= target_rows]
    if not fitting:
        # A single sequence already exceeds the budget: degrade to the smallest
        # valid tile instead of the whole problem (keeps pipelining, avoids OOM).
        # TODO(synk): L-tile with a 1-row halo for the k=3 conv once a single
        # sequence no longer fits VMEM.
        return min(valid)
    multi = [d for d in fitting if n // d >= 2]
    if multi:
        fitting = multi

    def score(d):
        rows = d * seq_len
        return (rows % 256 == 0, rows % 128 == 0, rows)

    return max(fitting, key=score)


def _nbytes(shape, dtype):
    return int(np.prod(shape)) * np.dtype(dtype).itemsize


@functools.partial(jax.jit, static_argnames=("down", "out_dtype"))
def tenant_layer(x_nlc, packed, down=False, out_dtype=jnp.float32):
    """x_nlc: (N, L, C_in) float32; returns (N, L_out, C_out) in out_dtype.

    Pass out_dtype=jnp.bfloat16 to halve output HBM writeback (v5e) when the
    consumer accepts bf16.
    """
    if down:
        # stride-2 on a k=1 conv == subsample then stride-1 conv (exact for
        # both the entry conv and the resize conv; both have kernel_size=1).
        x_nlc = x_nlc[:, ::2, :]
    n, seq_len, cin = x_nlc.shape
    width = packed["wg2"].shape[1]
    cout = packed["w3s"].shape[1]

    vmem_cap = _vmem_capacity_bytes()
    # Per-step row budget: ~1K rows on 64 MiB chips (v7x), ~2K on 128 MiB (v5e/v6e).
    target_rows = 1024 if vmem_cap <= (80 << 20) else 2048
    tb = _pick_batch_tile(n, seq_len, target_rows)
    tm = tb * seq_len                      # rows per grid step (multiple of L)
    m = n * seq_len
    x2d = x_nlc.reshape(m, cin)            # stays f32; bf16 cast happens in-kernel

    kernel = functools.partial(tenant_kernel, seq_len=seq_len, width=width)

    weight_buffers = 1 if _SINGLE_BUFFER_WEIGHTS else 2

    def const(shape):
        nd = len(shape)

        def idx(i):
            return (0,) * nd

        if _SINGLE_BUFFER_WEIGHTS:
            # Grid-invariant operands: a single pipeline buffer is enough.
            return pl.BlockSpec(shape, idx, pipeline_mode=pl.Buffered(1))
        return pl.BlockSpec(shape, idx)

    in_specs = [
        pl.BlockSpec((tm, cin), lambda i: (i, 0)),
        const((cin, width + cout)), const((1, width)), const((1, cout)),
        const((3, width, width)), const((1, width)),
        const((width, cout)), const((1, cout)),
    ]
    out_spec = pl.BlockSpec((tm, cout), lambda i: (i, 0))

    # Scoped-VMEM budget matching the actual pipeline: double-buffered
    # activation blocks, weight blocks (x1 or x2 depending on buffering),
    # f32 temporaries (not pipelined), clamped under the chip's physical VMEM.
    io_bytes = 2 * (_nbytes((tm, cin), x2d.dtype) + _nbytes((tm, cout), out_dtype))
    w_bytes = weight_buffers * (
        _nbytes((cin, width + cout), jnp.bfloat16)
        + _nbytes((3, width, width), jnp.bfloat16)
        + _nbytes((width, cout), jnp.bfloat16)
        + 2 * _nbytes((1, width), jnp.float32)
        + 2 * _nbytes((1, cout), jnp.float32))
    temp_bytes = _nbytes((tm, 5 * width + 3 * cout), jnp.float32)
    estimate = io_bytes + w_bytes + temp_bytes + (4 << 20)
    vmem_limit = int(max(min(estimate, vmem_cap - (8 << 20)), 16 << 20))
    vmem_limit = int(min(vmem_limit, vmem_cap))

    out2d = pl.pallas_call(
        kernel,
        out_shape=jax.ShapeDtypeStruct((m, cout), out_dtype),
        grid=(m // tm,),
        in_specs=in_specs,
        out_specs=out_spec,
        compiler_params=pltpu.CompilerParams(
            dimension_semantics=("parallel",),
            vmem_limit_bytes=vmem_limit),
    )(x2d, packed["w1r"], packed["t1"], packed["tr"], packed["wg2"],
      packed["t2"], packed["w3s"], packed["t3"])

    return out2d.reshape(n, seq_len, cout)


def tenant_layer_ref(x_nlc, params, down=False):
    """Pure-JAX f32 reference (same math as the module, inference-mode BN)."""
    x = x_nlc.astype(jnp.float32)
    if down:
        x = x[:, ::2, :]
    y1 = _leaky(x @ params["w1"] * params["s1"] + params["t1"])
    y_prev = jnp.pad(y1, ((0, 0), (1, 0), (0, 0)))[:, :-1, :]
    y_next = jnp.pad(y1, ((0, 0), (0, 1), (0, 0)))[:, 1:, :]
    y2 = (y_prev @ params["wg"][0] + y1 @ params["wg"][1]
          + y_next @ params["wg"][2])
    y2 = _leaky(y2 * params["s2"] + params["t2"])
    y3 = y2 @ params["w3"] * params["s3"] + params["t3"]
    ident = x @ params["wr"] * params["sr"] + params["tr"]
    return _leaky(y3 + ident)


if __name__ == "__main__":
    key = jax.random.PRNGKey(0)
    kx, kp = jax.random.split(key)

    # Small shapes consistent with the module: in_dim=4, mid_dim=64 -> width=128,
    # out_dim=128, batch=2, length=16, start=True -> down=False.
    n, seq_len, in_dim, mid_dim, out_dim = 2, 16, 4, 64, 128
    x = jax.random.normal(kx, (n, seq_len, in_dim), dtype=jnp.float32)  # (N, L, C)
    params = make_tenant_params(kp, in_dim, mid_dim, out_dim)
    packed = pack_tenant_params(params)

    out = tenant_layer(x, packed, down=False)
    out = jax.block_until_ready(out)

    ref = tenant_layer_ref(x, params, down=False)
    # bf16 matmul operands (f32 accumulation) vs f32 reference -> loose tol.
    np.testing.assert_allclose(np.asarray(out), np.asarray(ref),
                               rtol=2e-2, atol=2e-2)
    print("KERNEL_OK")
</pallas_src>

<mosaic_0001>
module attributes {stable_mosaic.version = 11 : i64} {
  func.func @tenant_kernel(%arg0: i32, %arg1: memref<16x4xf32, #tpu.memory_space<vmem>>, %arg2: memref<4x256xbf16, #tpu.memory_space<vmem>>, %arg3: memref<1x128xf32, #tpu.memory_space<vmem>>, %arg4: memref<1x128xf32, #tpu.memory_space<vmem>>, %arg5: memref<3x128x128xbf16, #tpu.memory_space<vmem>>, %arg6: memref<1x128xf32, #tpu.memory_space<vmem>>, %arg7: memref<128x128xbf16, #tpu.memory_space<vmem>>, %arg8: memref<1x128xf32, #tpu.memory_space<vmem>>, %arg9: memref<16x128xf32, #tpu.memory_space<vmem>>) attributes {dimension_semantics = [#tpu.dimension_semantics<parallel>], iteration_bounds = array<i64: 2>, scalar_prefetch = 0 : i64, scratch_operands = 0 : i64, tpu.core_type = #tpu.core_type<tc>, window_params = [{transform_indices = @transform_0, window_bounds = array<i64: 16, 4>}, {pipeline_mode = #tpu.pipeline_mode<synchronous>, transform_indices = @transform_1, window_bounds = array<i64: 4, 256>}, {pipeline_mode = #tpu.pipeline_mode<synchronous>, transform_indices = @transform_2, window_bounds = array<i64: 1, 128>}, {pipeline_mode = #tpu.pipeline_mode<synchronous>, transform_indices = @transform_3, window_bounds = array<i64: 1, 128>}, {pipeline_mode = #tpu.pipeline_mode<synchronous>, transform_indices = @transform_4, window_bounds = array<i64: 3, 128, 128>}, {pipeline_mode = #tpu.pipeline_mode<synchronous>, transform_indices = @transform_5, window_bounds = array<i64: 1, 128>}, {pipeline_mode = #tpu.pipeline_mode<synchronous>, transform_indices = @transform_6, window_bounds = array<i64: 128, 128>}, {pipeline_mode = #tpu.pipeline_mode<synchronous>, transform_indices = @transform_7, window_bounds = array<i64: 1, 128>}, {transform_indices = @transform_8, window_bounds = array<i64: 16, 128>}]} {
    %c0 = arith.constant 0 : index
    %c0_0 = arith.constant 0 : index
    %0 = vector.load %arg1[%c0, %c0_0] : memref<16x4xf32, #tpu.memory_space<vmem>>, vector<16x4xf32>
    %1 = arith.truncf %0 : vector<16x4xf32> to vector<16x4xbf16>
    %c0_1 = arith.constant 0 : index
    %c0_2 = arith.constant 0 : index
    %2 = vector.load %arg2[%c0_1, %c0_2] : memref<4x256xbf16, #tpu.memory_space<vmem>>, vector<4x256xbf16>
    %cst = arith.constant dense<0.000000e+00> : vector<16x256xf32>
    %3 = tpu.matmul %1, %2, %cst {dimension_numbers = #tpu.dot_dimension_numbers<[1], [0], [0], [1], [0, 0, 1, 1], [], []>} : vector<16x4xbf16>, vector<4x256xbf16>, vector<16x256xf32> -> vector<16x256xf32>
    %4 = vector.extract_strided_slice %3 {offsets = [0, 0], sizes = [16, 128], strides = [1, 1]} : vector<16x256xf32> to vector<16x128xf32>
    %c0_3 = arith.constant 0 : index
    %c0_4 = arith.constant 0 : index
    %5 = vector.load %arg3[%c0_3, %c0_4] : memref<1x128xf32, #tpu.memory_space<vmem>>, vector<1x128xf32>
    %6 = vector.broadcast %5 : vector<1x128xf32> to vector<16x128xf32>
    %7 = arith.addf %4, %6 : vector<16x128xf32>
    %cst_5 = arith.constant 0.00999999977 : f32
    %8 = vector.broadcast %cst_5 : f32 to vector<16x128xf32>
    %9 = arith.mulf %8, %7 : vector<16x128xf32>
    %10 = arith.maximumf %7, %9 : vector<16x128xf32>
    %11 = vector.extract_strided_slice %3 {offsets = [0, 128], sizes = [16, 128], strides = [1, 1]} : vector<16x256xf32> to vector<16x128xf32>
    %c0_6 = arith.constant 0 : index
    %c0_7 = arith.constant 0 : index
    %12 = vector.load %arg4[%c0_6, %c0_7] : memref<1x128xf32, #tpu.memory_space<vmem>>, vector<1x128xf32>
    %13 = vector.broadcast %12 : vector<1x128xf32> to vector<16x128xf32>
    %14 = arith.addf %11, %13 : vector<16x128xf32>
    %15 = tpu.iota {dimensions = array<i32: 0>} : vector<16x1xi32>
    %c16_i32 = arith.constant 16 : i32
    %c0_i32 = arith.constant 0 : i32
    %16 = arith.cmpi eq, %c16_i32, %c0_i32 : i32
    %c1_i32 = arith.constant 1 : i32
    %17 = arith.select %16, %c1_i32, %c16_i32 : i32
    %18 = vector.broadcast %17 : i32 to vector<16x1xi32>
    %19 = arith.remsi %15, %18 : vector<16x1xi32>
    %c0_i32_8 = arith.constant 0 : i32
    %20 = vector.broadcast %c0_i32_8 : i32 to vector<16x1xi32>
    %21 = arith.cmpi ne, %19, %20 : vector<16x1xi32>
    %c0_i32_9 = arith.constant 0 : i32
    %22 = vector.broadcast %c0_i32_9 : i32 to vector<16x1xi32>
    %23 = arith.cmpi slt, %19, %22 : vector<16x1xi32>
    %c0_i32_10 = arith.constant 0 : i32
    %24 = arith.cmpi slt, %17, %c0_i32_10 : i32
    %25 = vector.broadcast %24 : i1 to vector<16x1xi1>
    %26 = vector.broadcast %25 : vector<16x1xi1> to vector<16x1xi1>
    %27 = arith.xori %23, %26 : vector<16x1xi1>
    %28 = arith.andi %27, %21 : vector<16x1xi1>
    %29 = vector.broadcast %17 : i32 to vector<16x1xi32>
    %30 = arith.addi %19, %29 : vector<16x1xi32>
    %31 = arith.select %28, %30, %19 : vector<16x1xi1>, vector<16x1xi32>
    %c0_i32_11 = arith.constant 0 : i32
    %32 = vector.broadcast %c0_i32_11 : i32 to vector<16x1xi32>
    %33 = arith.cmpi eq, %31, %32 : vector<16x1xi32>
    %34 = vector.extract_strided_slice %10 {offsets = [15, 0], sizes = [1, 128], strides = [1, 1]} : vector<16x128xf32> to vector<1x128xf32>
    %35 = vector.extract_strided_slice %10 {offsets = [0, 0], sizes = [15, 128], strides = [1, 1]} : vector<16x128xf32> to vector<15x128xf32>
    %36 = tpu.concatenate %34, %35 in 0 : vector<1x128xf32>, vector<15x128xf32> -> vector<16x128xf32>
    %cst_12 = arith.constant 0.000000e+00 : f32
    %37 = vector.shape_cast %33 : vector<16x1xi1> to vector<16x1xi1>
    %38 = vector.broadcast %37 : vector<16x1xi1> to vector<16x128xi1>
    %39 = vector.broadcast %cst_12 : f32 to vector<16x128xf32>
    %40 = arith.select %38, %39, %36 : vector<16x128xi1>, vector<16x128xf32>
    %41 = arith.truncf %40 : vector<16x128xf32> to vector<16x128xbf16>
    %c15_i32 = arith.constant 15 : i32
    %42 = vector.broadcast %c15_i32 : i32 to vector<16x1xi32>
    %43 = arith.cmpi eq, %31, %42 : vector<16x1xi32>
    %44 = vector.extract_strided_slice %10 {offsets = [1, 0], sizes = [15, 128], strides = [1, 1]} : vector<16x128xf32> to vector<15x128xf32>
    %45 = vector.extract_strided_slice %10 {offsets = [0, 0], sizes = [1, 128], strides = [1, 1]} : vector<16x128xf32> to vector<1x128xf32>
    %46 = tpu.concatenate %44, %45 in 0 : vector<15x128xf32>, vector<1x128xf32> -> vector<16x128xf32>
    %cst_13 = arith.constant 0.000000e+00 : f32
    %47 = vector.shape_cast %43 : vector<16x1xi1> to vector<16x1xi1>
    %48 = vector.broadcast %47 : vector<16x1xi1> to vector<16x128xi1>
    %49 = vector.broadcast %cst_13 : f32 to vector<16x128xf32>
    %50 = arith.select %48, %49, %46 : vector<16x128xi1>, vector<16x128xf32>
    %51 = arith.truncf %50 : vector<16x128xf32> to vector<16x128xbf16>
    %52 = arith.truncf %10 : vector<16x128xf32> to vector<16x128xbf16>
    %c0_14 = arith.constant 0 : index
    %c0_15 = arith.constant 0 : index
    %c0_16 = arith.constant 0 : index
    %53 = vector.load %arg5[%c0_14, %c0_15, %c0_16] : memref<3x128x128xbf16, #tpu.memory_space<vmem>>, vector<1x128x128xbf16>
    %54 = vector.shape_cast %53 : vector<1x128x128xbf16> to vector<128x128xbf16>
    %cst_17 = arith.constant dense<0.000000e+00> : vector<16x128xf32>
    %55 = tpu.matmul %41, %54, %cst_17 {dimension_numbers = #tpu.dot_dimension_numbers<[1], [0], [0], [1], [0, 0, 1, 1], [], []>} : vector<16x128xbf16>, vector<128x128xbf16>, vector<16x128xf32> -> vector<16x128xf32>
    %c1 = arith.constant 1 : index
    %c0_18 = arith.constant 0 : index
    %c0_19 = arith.constant 0 : index
    %56 = vector.load %arg5[%c1, %c0_18, %c0_19] : memref<3x128x128xbf16, #tpu.memory_space<vmem>>, vector<1x128x128xbf16>
    %57 = vector.shape_cast %56 : vector<1x128x128xbf16> to vector<128x128xbf16>
    %cst_20 = arith.constant dense<0.000000e+00> : vector<16x128xf32>
    %58 = tpu.matmul %52, %57, %cst_20 {dimension_numbers = #tpu.dot_dimension_numbers<[1], [0], [0], [1], [0, 0, 1, 1], [], []>} : vector<16x128xbf16>, vector<128x128xbf16>, vector<16x128xf32> -> vector<16x128xf32>
    %59 = arith.addf %55, %58 : vector<16x128xf32>
    %c2 = arith.constant 2 : index
    %c0_21 = arith.constant 0 : index
    %c0_22 = arith.constant 0 : index
    %60 = vector.load %arg5[%c2, %c0_21, %c0_22] : memref<3x128x128xbf16, #tpu.memory_space<vmem>>, vector<1x128x128xbf16>
    %61 = vector.shape_cast %60 : vector<1x128x128xbf16> to vector<128x128xbf16>
    %cst_23 = arith.constant dense<0.000000e+00> : vector<16x128xf32>
    %62 = tpu.matmul %51, %61, %cst_23 {dimension_numbers = #tpu.dot_dimension_numbers<[1], [0], [0], [1], [0, 0, 1, 1], [], []>} : vector<16x128xbf16>, vector<128x128xbf16>, vector<16x128xf32> -> vector<16x128xf32>
    %63 = arith.addf %59, %62 : vector<16x128xf32>
    %c0_24 = arith.constant 0 : index
    %c0_25 = arith.constant 0 : index
    %64 = vector.load %arg6[%c0_24, %c0_25] : memref<1x128xf32, #tpu.memory_space<vmem>>, vector<1x128xf32>
    %65 = vector.broadcast %64 : vector<1x128xf32> to vector<16x128xf32>
    %66 = arith.addf %63, %65 : vector<16x128xf32>
    %cst_26 = arith.constant 0.00999999977 : f32
    %67 = vector.broadcast %cst_26 : f32 to vector<16x128xf32>
    %68 = arith.mulf %67, %66 : vector<16x128xf32>
    %69 = arith.maximumf %66, %68 : vector<16x128xf32>
    %70 = arith.truncf %69 : vector<16x128xf32> to vector<16x128xbf16>
    %c0_27 = arith.constant 0 : index
    %c0_28 = arith.constant 0 : index
    %71 = vector.load %arg7[%c0_27, %c0_28] : memref<128x128xbf16, #tpu.memory_space<vmem>>, vector<128x128xbf16>
    %cst_29 = arith.constant dense<0.000000e+00> : vector<16x128xf32>
    %72 = tpu.matmul %70, %71, %cst_29 {dimension_numbers = #tpu.dot_dimension_numbers<[1], [0], [0], [1], [0, 0, 1, 1], [], []>} : vector<16x128xbf16>, vector<128x128xbf16>, vector<16x128xf32> -> vector<16x128xf32>
    %c0_30 = arith.constant 0 : index
    %c0_31 = arith.constant 0 : index
    %73 = vector.load %arg8[%c0_30, %c0_31] : memref<1x128xf32, #tpu.memory_space<vmem>>, vector<1x128xf32>
    %74 = vector.broadcast %73 : vector<1x128xf32> to vector<16x128xf32>
    %75 = arith.addf %72, %74 : vector<16x128xf32>
    %76 = arith.addf %75, %14 : vector<16x128xf32>
    %cst_32 = arith.constant 0.00999999977 : f32
    %77 = vector.broadcast %cst_32 : f32 to vector<16x128xf32>
    %78 = arith.mulf %77, %76 : vector<16x128xf32>
    %79 = arith.maximumf %76, %78 : vector<16x128xf32>
    %c0_33 = arith.constant 0 : index
    %c0_34 = arith.constant 0 : index
    %80 = vector.load %arg9[%c0_33, %c0_34] : memref<16x128xf32, #tpu.memory_space<vmem>>, vector<16x128xf32>
    tpu.vector_store %arg9[%c0_33, %c0_34], %79 {strides = array<i32>} : memref<16x128xf32, #tpu.memory_space<vmem>>, vector<16x128xf32>,
    return
  }
  func.func @transform_0(%arg0: i32) -> (i32, i32) {
    %c0_i32 = arith.constant 0 : i32
    %c0_i32_0 = arith.constant 0 : i32
    return %arg0, %c0_i32 : i32, i32
  }
  func.func @transform_1(%arg0: i32) -> (i32, i32) {
    %c0_i32 = arith.constant 0 : i32
    %c0_i32_0 = arith.constant 0 : i32
    %c0_i32_1 = arith.constant 0 : i32
    return %c0_i32, %c0_i32_0 : i32, i32
  }
  func.func @transform_2(%arg0: i32) -> (i32, i32) {
    %c0_i32 = arith.constant 0 : i32
    %c0_i32_0 = arith.constant 0 : i32
    %c0_i32_1 = arith.constant 0 : i32
    return %c0_i32, %c0_i32_0 : i32, i32
  }
  func.func @transform_3(%arg0: i32) -> (i32, i32) {
    %c0_i32 = arith.constant 0 : i32
    %c0_i32_0 = arith.constant 0 : i32
    %c0_i32_1 = arith.constant 0 : i32
    return %c0_i32, %c0_i32_0 : i32, i32
  }
  func.func @transform_4(%arg0: i32) -> (i32, i32, i32) {
    %c0_i32 = arith.constant 0 : i32
    %c0_i32_0 = arith.constant 0 : i32
    %c0_i32_1 = arith.constant 0 : i32
    %c0_i32_2 = arith.constant 0 : i32
    return %c0_i32, %c0_i32_0, %c0_i32_1 : i32, i32, i32
  }
  func.func @transform_5(%arg0: i32) -> (i32, i32) {
    %c0_i32 = arith.constant 0 : i32
    %c0_i32_0 = arith.constant 0 : i32
    %c0_i32_1 = arith.constant 0 : i32
    return %c0_i32, %c0_i32_0 : i32, i32
  }
  func.func @transform_6(%arg0: i32) -> (i32, i32) {
    %c0_i32 = arith.constant 0 : i32
    %c0_i32_0 = arith.constant 0 : i32
    %c0_i32_1 = arith.constant 0 : i32
    return %c0_i32, %c0_i32_0 : i32, i32
  }
  func.func @transform_7(%arg0: i32) -> (i32, i32) {
    %c0_i32 = arith.constant 0 : i32
    %c0_i32_0 = arith.constant 0 : i32
    %c0_i32_1 = arith.constant 0 : i32
    return %c0_i32, %c0_i32_0 : i32, i32
  }
  func.func @transform_8(%arg0: i32) -> (i32, i32) {
    %c0_i32 = arith.constant 0 : i32
    %c0_i32_0 = arith.constant 0 : i32
    return %arg0, %c0_i32 : i32, i32
  }
}

</mosaic_0001>

<llo_original>
// kernel: tenant_layer.1
$region0: #{tenant_layer.1}
  #allocation0 [shape = 'u32[]', space=smem, size = 0x4, offset = 0x4, fixed_abs, tag = 'smem constant byte address 0x4 - core index']
  #allocation1 [shape = 'u32[144,128]{1,0:T(1,128)}', space=vmem, size = 0x12000, scoped, tag = 'internal scratch']
  %s0 = inlined_call_operand.vmem [shape: f32[32,4], index: 0, kind: input, shape index: {}]
  %s1 = inlined_call_operand.hbm [shape: bf16[4,256], index: 1, kind: input, shape index: {}]
  %s2 = inlined_call_operand.vmem [shape: f32[1,128], index: 2, kind: input, shape index: {}]
  %s3 = inlined_call_operand.vmem [shape: f32[1,128], index: 3, kind: input, shape index: {}]
  %s4 = inlined_call_operand.hbm [shape: bf16[3,128,128], index: 4, kind: input, shape index: {}]
  %s5 = inlined_call_operand.hbm [shape: f32[1,128], index: 5, kind: input, shape index: {}]
  %s6 = inlined_call_operand.vmem [shape: bf16[128,128], index: 6, kind: input, shape index: {}]
  %s7 = inlined_call_operand.hbm [shape: f32[1,128], index: 7, kind: input, shape index: {}]
  %s8 = inlined_call_operand.hbm [shape: f32[32,128], index: 8, kind: output, shape index: {}]
  %s9 = sld [smem:[#allocation0]]
  $region81: #{tenant_layer.1} parent=0
    _
  %s11 = ssub.s32 1, %s9
  %s12 = scalar_select 0, %s11, %s9
  $region1: #{tenant_layer.1} parent=0
    #allocation2 [shape = 'u8[2048]{0}', space=vmem, size = 0x800, scoped, tag = 'input window, operand 1, single buffered']
    #allocation3 [shape = 's32[2]{0}', space=sflag, size = 0x8, scoped, tag = 'scoped memory for tenant_layer.1']
    #allocation4 [shape = 's32[2]{0}', space=sflag, size = 0x8, scoped, tag = 'scoped memory for tenant_layer.1']
    #allocation5 [shape = 'u8[98304]{0}', space=vmem, size = 0x18000, scoped, tag = 'input window, operand 4, single buffered']
    #allocation6 [shape = 's32[1]{0}', space=sflag, size = 0x4, scoped, tag = 'scoped memory for tenant_layer.1']
    #allocation7 [shape = 'u8[512]{0}', space=vmem, size = 0x400, scoped, tag = 'input window, operand 5, single buffered']
    #allocation8 [shape = 'u8[512]{0}', space=vmem, size = 0x400, scoped, tag = 'input window, operand 7, single buffered']
    #allocation9 [shape = 's32[1]{0}', space=sflag, size = 0x4, scoped, tag = 'scoped memory for tenant_layer.1']
    #allocation10 [shape = 'u8[16384]{0}', space=vmem, size = 0x4000, scoped, tag = 'output window, operand 0']
    %13 = vsyncpa [#allocation3], 0
    %14 = vsyncpa [#allocation6], 0
    %15 = vsyncpa [#allocation9], 0
    %16 = vsyncpa [#allocation4], 0
    %s17 = scalar_lea.sflag [#allocation4], 1
    %18 = vsyncpa %s17, 0
    loop: start=0, step=1, limit=4
    $region2: #{tenant_layer.1} parent=1 // loop_pre_header
      _
    $region3: #{tenant_layer.1} parent=1 // loop_header
      %s20 = sphi 0, %s24
      %p21 = scmp.ge.s32.totalorder %s20, 4
      %s30 = sphi 0, %s32
      %s33 = sphi 0, %s30
      %s34 = sphi 0, %s33
      %s50 = sphi 0, %s34
      %s54 = sphi 0, %s54
      %s56 = sphi 0, %s54
      %s57 = sphi 0, %s56
      %s71 = sphi 0, %s57
      %s75 = sphi 0, %s75
      %s77 = sphi 0, %s75
      %s78 = sphi 0, %s77
      %s92 = sphi 0, %s78
      %s96 = sphi 0, %s96
      %s98 = sphi 0, %s96
      %s99 = sphi 0, %s98
      %s113 = sphi 0, %s99
      %s117 = sphi 0, %s117
      %s119 = sphi 0, %s117
      %s120 = sphi 0, %s119
      %s134 = sphi 0, %s120
      %s138 = sphi 0, %s138
      %s140 = sphi 0, %s138
      %s141 = sphi 0, %s140
      %s155 = sphi 0, %s141
      %s159 = sphi 0, %s159
      %s161 = sphi 0, %s159
      %s162 = sphi 0, %s161
      %s176 = sphi 0, %s162
      %s180 = sphi 0, %s180
      %s182 = sphi 0, %s180
      %s183 = sphi 0, %s182
      %s197 = sphi 0, %s183
      %s203 = sphi 0, %s205
      %s206 = sphi 0, %s203
      %s207 = sphi 0, %s206
      %s223 = sphi 0, %s207
    $region4: #{tenant_layer.1} parent=1 // loop_header_branch
      %23 = sbr.rel (%p21) target = $region8
    $region5: #{tenant_layer.1} parent=1 // loop_body
      %s25 = ssub.s32 %s20, 1
      %s26 = ssub.s32 %s20, 2
      %s27 = sadd.s32 %s20, 1
      %s28 = ssub.s32 %s20, %s27
      %p29 = scmp.eq.s32.totalorder %s28, 0
      %s31 = sadd.s32 %s30, 1
      %s32 = scalar_select %p29, %s30, %s31
      %p35 = pneg %p29
      %p36 = scmp.eq.s32.totalorder %s20, 1
      %p37 = por %p35, %p36
      %p38 = scmp.ne.s32.totalorder %s30, %s33
      %p39 = scmp.eq.s32.totalorder %s20, 0
      %p40 = por %p38, %p39
      %p41 = scmp.ne.s32.totalorder %s30, %s33
      %p42 = scmp.eq.s32.totalorder %s25, 1
      %p43 = por %p41, %p42
      %p44 = scmp.ne.s32.totalorder %s33, %s34
      %p45 = scmp.eq.s32.totalorder %s25, 0
      %p46 = por %p44, %p45
      %p47 = scmp.ne.s32.totalorder %s33, %s34
      %p48 = scmp.eq.s32.totalorder %s26, 1
      %p49 = por %p47, %p48
      %p51 = scmp.ne.s32.totalorder %s34, %s50
      %p52 = scmp.eq.s32.totalorder %s26, 0
      %p53 = por %p51, %p52
      %s55 = sadd.s32 %s54, 1
      %p58 = scmp.eq.s32.totalorder %s20, 1
      %p59 = scmp.ne.s32.totalorder %s54, %s56
      %p60 = scmp.eq.s32.totalorder %s20, 0
      %p61 = por %p59, %p60
      %p62 = scmp.ne.s32.totalorder %s54, %s56
      %p63 = scmp.eq.s32.totalorder %s25, 1
      %p64 = por %p62, %p63
      %p65 = scmp.ne.s32.totalorder %s56, %s57
      %p66 = scmp.eq.s32.totalorder %s25, 0
      %p67 = por %p65, %p66
      %p68 = scmp.ne.s32.totalorder %s56, %s57
      %p69 = scmp.eq.s32.totalorder %s26, 1
      %p70 = por %p68, %p69
      %p72 = scmp.ne.s32.totalorder %s57, %s71
      %p73 = scmp.eq.s32.totalorder %s26, 0
      %p74 = por %p72, %p73
      %s76 = sadd.s32 %s75, 1
      %p79 = scmp.eq.s32.totalorder %s20, 1
      %p80 = scmp.ne.s32.totalorder %s75, %s77
      %p81 = scmp.eq.s32.totalorder %s20, 0
      %p82 = por %p80, %p81
      %p83 = scmp.ne.s32.totalorder %s75, %s77
      %p84 = scmp.eq.s32.totalorder %s25, 1
      %p85 = por %p83, %p84
      %p86 = scmp.ne.s32.totalorder %s77, %s78
      %p87 = scmp.eq.s32.totalorder %s25, 0
      %p88 = por %p86, %p87
      %p89 = scmp.ne.s32.totalorder %s77, %s78
      %p90 = scmp.eq.s32.totalorder %s26, 1
      %p91 = por %p89, %p90
      %p93 = scmp.ne.s32.totalorder %s78, %s92
      %p94 = scmp.eq.s32.totalorder %s26, 0
      %p95 = por %p93, %p94
      %s97 = sadd.s32 %s96, 1
      %p100 = scmp.eq.s32.totalorder %s20, 1
      %p101 = scmp.ne.s32.totalorder %s96, %s98
      %p102 = scmp.eq.s32.totalorder %s20, 0
      %p103 = por %p101, %p102
      %p104 = scmp.ne.s32.totalorder %s96, %s98
      %p105 = scmp.eq.s32.totalorder %s25, 1
      %p106 = por %p104, %p105
      %p107 = scmp.ne.s32.totalorder %s98, %s99
      %p108 = scmp.eq.s32.totalorder %s25, 0
      %p109 = por %p107, %p108
      %p110 = scmp.ne.s32.totalorder %s98, %s99
      %p111 = scmp.eq.s32.totalorder %s26, 1
      %p112 = por %p110, %p111
      %p114 = scmp.ne.s32.totalorder %s99, %s113
      %p115 = scmp.eq.s32.totalorder %s26, 0
      %p116 = por %p114, %p115
      %s118 = sadd.s32 %s117, 1
      %p121 = scmp.eq.s32.totalorder %s20, 1
      %p122 = scmp.ne.s32.totalorder %s117, %s119
      %p123 = scmp.eq.s32.totalorder %s20, 0
      %p124 = por %p122, %p123
      %p125 = scmp.ne.s32.totalorder %s117, %s119
      %p126 = scmp.eq.s32.totalorder %s25, 1
      %p127 = por %p125, %p126
      %p128 = scmp.ne.s32.totalorder %s119, %s120
      %p129 = scmp.eq.s32.totalorder %s25, 0
      %p130 = por %p128, %p129
      %p131 = scmp.ne.s32.totalorder %s119, %s120
      %p132 = scmp.eq.s32.totalorder %s26, 1
      %p133 = por %p131, %p132
      %p135 = scmp.ne.s32.totalorder %s120, %s134
      %p136 = scmp.eq.s32.totalorder %s26, 0
      %p137 = por %p135, %p136
      %s139 = sadd.s32 %s138, 1
      %p142 = scmp.eq.s32.totalorder %s20, 1
      %p143 = scmp.ne.s32.totalorder %s138, %s140
      %p144 = scmp.eq.s32.totalorder %s20, 0
      %p145 = por %p143, %p144
      %p146 = scmp.ne.s32.totalorder %s138, %s140
      %p147 = scmp.eq.s32.totalorder %s25, 1
      %p148 = por %p146, %p147
      %p149 = scmp.ne.s32.totalorder %s140, %s141
      %p150 = scmp.eq.s32.totalorder %s25, 0
      %p151 = por %p149, %p150
      %p152 = scmp.ne.s32.totalorder %s140, %s141
      %p153 = scmp.eq.s32.totalorder %s26, 1
      %p154 = por %p152, %p153
      %p156 = scmp.ne.s32.totalorder %s141, %s155
      %p157 = scmp.eq.s32.totalorder %s26, 0
      %p158 = por %p156, %p157
      %s160 = sadd.s32 %s159, 1
      %p163 = scmp.eq.s32.totalorder %s20, 1
      %p164 = scmp.ne.s32.totalorder %s159, %s161
      %p165 = scmp.eq.s32.totalorder %s20, 0
      %p166 = por %p164, %p165
      %p167 = scmp.ne.s32.totalorder %s159, %s161
      %p168 = scmp.eq.s32.totalorder %s25, 1
      %p169 = por %p167, %p168
      %p170 = scmp.ne.s32.totalorder %s161, %s162
      %p171 = scmp.eq.s32.totalorder %s25, 0
      %p172 = por %p170, %p171
      %p173 = scmp.ne.s32.totalorder %s161, %s162
      %p174 = scmp.eq.s32.totalorder %s26, 1
      %p175 = por %p173, %p174
      %p177 = scmp.ne.s32.totalorder %s162, %s176
      %p178 = scmp.eq.s32.totalorder %s26, 0
      %p179 = por %p177, %p178
      %s181 = sadd.s32 %s180, 1
      %p184 = scmp.eq.s32.totalorder %s20, 1
      %p185 = scmp.ne.s32.totalorder %s180, %s182
      %p186 = scmp.eq.s32.totalorder %s20, 0
      %p187 = por %p185, %p186
      %p188 = scmp.ne.s32.totalorder %s180, %s182
      %p189 = scmp.eq.s32.totalorder %s25, 1
      %p190 = por %p188, %p189
      %p191 = scmp.ne.s32.totalorder %s182, %s183
      %p192 = scmp.eq.s32.totalorder %s25, 0
      %p193 = por %p191, %p192
      %p194 = scmp.ne.s32.totalorder %s182, %s183
      %p195 = scmp.eq.s32.totalorder %s26, 1
      %p196 = por %p194, %p195
      %p198 = scmp.ne.s32.totalorder %s183, %s197
      %p199 = scmp.eq.s32.totalorder %s26, 0
      %p200 = por %p198, %p199
      %s201 = ssub.s32 %s20, %s27
      %p202 = scmp.eq.s32.totalorder %s201, 0
      %s204 = sadd.s32 %s203, 1
      %s205 = scalar_select %p202, %s203, %s204
      %p208 = pneg %p202
      %p209 = scmp.eq.s32.totalorder %s20, 1
      %p210 = por %p208, %p209
      %p211 = scmp.ne.s32.totalorder %s203, %s206
      %p212 = scmp.eq.s32.totalorder %s20, 0
      %p213 = por %p211, %p212
      %p214 = scmp.ne.s32.totalorder %s203, %s206
      %p215 = scmp.eq.s32.totalorder %s25, 1
      %p216 = por %p214, %p215
      %p217 = scmp.ne.s32.totalorder %s206, %s207
      %p218 = scmp.eq.s32.totalorder %s25, 0
      %p219 = por %p217, %p218
      %p220 = scmp.ne.s32.totalorder %s206, %s207
      %p221 = scmp.eq.s32.totalorder %s26, 1
      %p222 = por %p220, %p221
      %p224 = scmp.ne.s32.totalorder %s207, %s223
      %p225 = scmp.eq.s32.totalorder %s26, 0
      %p226 = por %p224, %p225
      %p227 = scmp.le.s32.totalorder 1, %s20
      %p228 = scmp.lt.s32.totalorder %s20, 3
      %p229 = pnand %p227, %p228
      %p230 = pneg %p229
      // Predicated region
      $region9: #{tenant_layer.1} parent=5 // pred_check
        _
      $region10: #{tenant_layer.1} parent=5 // pred_check_branch
        %232 = sbr.rel (%p229) target = $region12
      $region11: #{tenant_layer.1} parent=5 // pred_region
        %s233 = ssub.s32 %s20, 1
        // Predicated region
        $region13: #{tenant_layer.1} parent=11 // pred_check
          %p234 = pneg %p67
        $region14: #{tenant_layer.1} parent=11 // pred_check_branch
          %236 = sbr.rel (%p234) target = $region16
        $region15: #{tenant_layer.1} parent=11 // pred_region
          %s238 = ssub.s32 64, 64
          %239 = vsyncadd [#allocation3], %s238
          %s241 = sshll.u32 [#allocation2], 4
          %s242 = int_to_ptr.vmem [resolvable:$true] %s241
          %244 = dma.hbm_to_vmem [thread:$0]  %s1, 64, %s242, [#allocation3]
        $region16: #{tenant_layer.1} parent=11 // pred_fallthru
          _
        // Predicated region
        $region17: #{tenant_layer.1} parent=11 // pred_check
          %p245 = pneg %p88
        $region18: #{tenant_layer.1} parent=11 // pred_check_branch
          %247 = sbr.rel (%p245) target = $region20
        $region19: #{tenant_layer.1} parent=11 // pred_region
          _
        $region20: #{tenant_layer.1} parent=11 // pred_fallthru
          _
        // Predicated region
        $region21: #{tenant_layer.1} parent=11 // pred_check
          %p248 = pneg %p109
        $region22: #{tenant_layer.1} parent=11 // pred_check_branch
          %250 = sbr.rel (%p248) target = $region24
        $region23: #{tenant_layer.1} parent=11 // pred_region
          _
        $region24: #{tenant_layer.1} parent=11 // pred_fallthru
          _
        // Predicated region
        $region25: #{tenant_layer.1} parent=11 // pred_check
          %p251 = pneg %p130
        $region26: #{tenant_layer.1} parent=11 // pred_check_branch
          %253 = sbr.rel (%p251) target = $region28
        $region27: #{tenant_layer.1} parent=11 // pred_region
          %s255 = ssub.s32 3072, 3072
          %256 = vsyncadd [#allocation6], %s255
          %s257 = sshll.u32 [#allocation5], 4
          %s258 = int_to_ptr.vmem [resolvable:$true] %s257
          %263 = dma.hbm_to_vmem [thread:$0]  %s4, 3072, %s258, [#allocation6], 64, 64, 4
        $region28: #{tenant_layer.1} parent=11 // pred_fallthru
          _
        // Predicated region
        $region29: #{tenant_layer.1} parent=11 // pred_check
          %p264 = pneg %p151
        $region30: #{tenant_layer.1} parent=11 // pred_check_branch
          %266 = sbr.rel (%p264) target = $region32
        $region31: #{tenant_layer.1} parent=11 // pred_region
          %s268 = ssub.s32 16, 16
          %269 = vsyncadd [#allocation6], %s268
          %s271 = sshll.u32 [#allocation7], 4
          %s272 = int_to_ptr.vmem [resolvable:$true] %s271
          %274 = dma.hbm_to_vmem [thread:$0]  %s5, 16, %s272, [#allocation6]
        $region32: #{tenant_layer.1} parent=11 // pred_fallthru
          _
        // Predicated region
        $region33: #{tenant_layer.1} parent=11 // pred_check
          %p275 = pneg %p172
        $region34: #{tenant_layer.1} parent=11 // pred_check_branch
          %277 = sbr.rel (%p275) target = $region36
        $region35: #{tenant_layer.1} parent=11 // pred_region
          _
        $region36: #{tenant_layer.1} parent=11 // pred_fallthru
          _
        // Predicated region
        $region37: #{tenant_layer.1} parent=11 // pred_check
          %p278 = pneg %p193
        $region38: #{tenant_layer.1} parent=11 // pred_check_branch
          %280 = sbr.rel (%p278) target = $region40
        $region39: #{tenant_layer.1} parent=11 // pred_region
          %s282 = ssub.s32 16, 16
          %283 = vsyncadd [#allocation9], %s282
          %s285 = sshll.u32 [#allocation8], 4
          %s286 = int_to_ptr.vmem [resolvable:$true] %s285
          %288 = dma.hbm_to_vmem [thread:$0]  %s7, 16, %s286, [#allocation9]
        $region40: #{tenant_layer.1} parent=11 // pred_fallthru
          _
      $region12: #{tenant_layer.1} parent=5 // pred_fallthru
        _
      %p289 = scmp.lt.s32.totalorder %s20, 2
      // Predicated region
      $region41: #{tenant_layer.1} parent=5 // pred_check
        %p290 = pneg %p289
      $region42: #{tenant_layer.1} parent=5 // pred_check_branch
        %292 = sbr.rel (%p290) target = $region44
      $region43: #{tenant_layer.1} parent=5 // pred_region
        // Predicated region
        $region45: #{tenant_layer.1} parent=43 // pred_check
          %p293 = pneg %p40
        $region46: #{tenant_layer.1} parent=43 // pred_check_branch
          %295 = sbr.rel (%p293) target = $region48
        $region47: #{tenant_layer.1} parent=43 // pred_region
          %s296 = smul.u32 2, %s20
          %p297 = scmp.lt.s32.totalorder %s296, 3
          %s298 = scalar_select %p297, %s296, 3
          %s299 = smul.addr %s298, 8
          %s300 = scalar_lea.vmem %s0, %s299
          %s301 = smul.u32 2, %s20
        $region48: #{tenant_layer.1} parent=43 // pred_fallthru
          _
      $region44: #{tenant_layer.1} parent=5 // pred_fallthru
        _
      %p302 = scmp.le.s32.totalorder 1, %s20
      %p303 = scmp.lt.s32.totalorder %s20, 3
      %p304 = pnand %p302, %p303
      %p305 = pneg %p304
      // Predicated region
      $region49: #{tenant_layer.1} parent=5 // pred_check
        _
      $region50: #{tenant_layer.1} parent=5 // pred_check_branch
        %307 = sbr.rel (%p304) target = $region52
      $region51: #{tenant_layer.1} parent=5 // pred_region
        %s308 = ssub.s32 %s20, 1
        // Predicated region
        $region53: #{tenant_layer.1} parent=51 // pred_check
          %p309 = pneg %p67
        $region54: #{tenant_layer.1} parent=51 // pred_check_branch
          %311 = sbr.rel (%p309) target = $region56
        $region55: #{tenant_layer.1} parent=51 // pred_region
          %312 = dma.done [#allocation3], 64
        $region56: #{tenant_layer.1} parent=51 // pred_fallthru
          _
        // Predicated region
        $region57: #{tenant_layer.1} parent=51 // pred_check
          %p313 = pneg %p130
        $region58: #{tenant_layer.1} parent=51 // pred_check_branch
          %315 = sbr.rel (%p313) target = $region60
        $region59: #{tenant_layer.1} parent=51 // pred_region
          %316 = dma.done [#allocation6], 3072
        $region60: #{tenant_layer.1} parent=51 // pred_fallthru
          _
        // Predicated region
        $region61: #{tenant_layer.1} parent=51 // pred_check
          %p317 = pneg %p151
        $region62: #{tenant_layer.1} parent=51 // pred_check_branch
          %319 = sbr.rel (%p317) target = $region64
        $region63: #{tenant_layer.1} parent=51 // pred_region
          %320 = dma.done [#allocation6], 16
        $region64: #{tenant_layer.1} parent=51 // pred_fallthru
          _
        // Predicated region
        $region65: #{tenant_layer.1} parent=51 // pred_check
          %p321 = pneg %p193
        $region66: #{tenant_layer.1} parent=51 // pred_check_branch
          %323 = sbr.rel (%p321) target = $region68
        $region67: #{tenant_layer.1} parent=51 // pred_region
          %324 = dma.done [#allocation9], 16
        $region68: #{tenant_layer.1} parent=51 // pred_fallthru
          _
        %s325 = smul.u32 2, %s25
        %p326 = scmp.lt.s32.totalorder %s325, 3
        %s327 = scalar_select %p326, %s325, 3
        %s328 = smul.addr %s327, 8
        %s329 = scalar_lea.vmem %s0, %s328
        %p330 = pneg %p46
        %p331 = pneg %p43
        %p332 = pneg %p67
        %p333 = pneg %p64
        %p334 = pneg %p88
        %p335 = pneg %p85
        %p336 = pneg %p109
        %p337 = pneg %p106
        %p338 = pneg %p130
        %p339 = pneg %p127
        %p340 = pneg %p151
        %p341 = pneg %p148
        %p342 = pneg %p172
        %p343 = pneg %p169
        %p344 = pneg %p193
        %p345 = pneg %p190
        %p346 = pneg %p219
        %p347 = pneg %p216
        %s348 = sand.u32 %s206, 1
        %s349 = scalar_lea.sflag [#allocation4], %s348
        %s350 = sand.u32 %s206, 1
        %s351 = smul.addr %s350, 16
        %s352 = scalar_lea.vmem [#allocation10], %s351
        %s353 = smul.u32 2, %s25
        %p354 = scmp.lt.s32.totalorder %s353, 3
        %s355 = scalar_select %p354, %s353, 3
        %s356 = smul.addr %s355, 8
        %s357 = scalar_lea.vmem %s0, %s356
        %s358 = smul.u32 2, %s25
        %s359 = smul.u32 2, %s25
        %v361 = vld [vmem:[%s357] sm:$0xff]
        %v362 = vld [vmem:[%s357 + $0x8] sm:$0xff]
        %v363 = vpack.c.bf16 %v362, %v361
        %v364 = vld [vmem:[#allocation2] sm:$0xf]
        %v367 = vunpack.c.l.s4 1983009808
        %v368 = vunpack.c.0.s8 %v367
        %v369 = vlaneseq
        %v370 = vshrl.u32 %v369, 7
        %v371 = vsub.s32 %v368, %v370
        %v372 = vrot.slane %v364, %v371
        %v373 = vcombine.high %v372, %v372
        %vm374 = vcmask 31744
        %v376 = vsel %vm374, %v363, 0
        %vm378 = vcmask 1041408
        %v380 = vsel %vm378, %v372, 0
        %v383 = vsel %vm378, %v373, 0
        %385 = vmatprep.subr.bf16.mxu0 %v383
        %386 = vmatpush1.bf16.msra.mxu0 %v380
        %387 = vmatprep.subr.bf16.mxu0 0
        %388 = vmatpush1.bf16.msra.mxu0 0
        %389 = vmatprep.subr.bf16.mxu0 0
        %390 = vmatpush1.bf16.msra.mxu0 0
        %391 = vmatprep.subr.bf16.mxu0 0
        %392 = vmatpush1.bf16.msra.mxu0 0
        %393 = vmatprep.subr.bf16.mxu0 0
        %394 = vmatpush1.bf16.msra.mxu0 0
        %395 = vmatprep.subr.bf16.mxu0 0
        %396 = vmatpush1.bf16.msra.mxu0 0
        %397 = vmatprep.subr.bf16.mxu0 0
        %398 = vmatpush1.bf16.msra.mxu0 0
        %399 = vmatprep.subr.bf16.mxu0 0
        %400 = vmatpush1.bf16.msra.mxu0 0
        %401 = vmatprep.subr.bf16.mxu0 0
        %402 = vmatpush1.bf16.msra.mxu0 0
        %403 = vmatprep.subr.bf16.mxu0 0
        %404 = vmatpush1.bf16.msra.mxu0 0
        %405 = vmatprep.subr.bf16.mxu0 0
        %406 = vmatpush1.bf16.msra.mxu0 0
        %407 = vmatprep.subr.bf16.mxu0 0
        %408 = vmatpush1.bf16.msra.mxu0 0
        %409 = vmatprep.subr.bf16.mxu0 0
        %410 = vmatpush1.bf16.msra.mxu0 0
        %411 = vmatprep.subr.bf16.mxu0 0
        %412 = vmatpush1.bf16.msra.mxu0 0
        %413 = vmatprep.subr.bf16.mxu0 0
        %414 = vmatpush1.bf16.msra.mxu0 0
        %415 = vmatprep.subr.bf16.mxu0 0
        %416 = vmatpush1.bf16.msra.mxu0 0
        %417 = vmatprep.mubr.bf16.mxu0 0
        %418 = vmatmul.mubr.bf16.gmra.mrb[0].mxu0 %v376
        %v419 = vpop.f32.mrb[0].mxu0
        %v420 = vadd.f32 0.0, %v419
        %v421 = vpop.f32.mrb[0].mxu0
        %v422 = vadd.f32 0.0, %v421
        %v423 = vpop.f32.mrb[0].mxu0
        %v424 = vadd.f32 0.0, %v423
        %v425 = vpop.f32.mrb[0].mxu0
        %v426 = vadd.f32 0.0, %v425
        %427 = vdwg.mxu0
        %v428 = vld [vmem:[%s2] sm:$0x1]
        %v430 = vlaneseq
        %v431 = vshrl.u32 %v430, 7
        %v432 = vsub.s32 0, %v431
        %v433 = vrot.slane %v428, %v432
        %v435 = vadd.f32 %v420, %v433
        %v436 = vadd.f32 %v424, %v433
        %v437 = vmul.f32 %v435, 0.01
        %v438 = vmul.f32 %v436, 0.01
        %v439 = vmax.f32 %v435, %v437
        %v440 = vmax.f32 %v436, %v438
        %v441 = vld [vmem:[%s3] sm:$0x1]
        %v443 = vlaneseq
        %v444 = vshrl.u32 %v443, 7
        %v445 = vsub.s32 0, %v444
        %v446 = vrot.slane %v441, %v445
        %v448 = vadd.f32 %v422, %v446
        %v449 = vadd.f32 %v426, %v446
        %v450 = vlaneseq
        %v451 = vshrl.u32 %v450, 7
        %v452 = vadd.s32 %v451, 8
        %vm453 = vcmp.lt.s32.totalorder %v451, 0
        %v454 = vsub.s32 0, %v451
        %v455 = vsel %vm453, %v454, %v451
        %v456 = vshrl.u32 %v455, 4
        %v457 = vand.u32 %v455, 15
        %v458 = vsub.s32 0, %v457
        %v459 = vsel %vm453, %v458, %v457
        %vm460 = vcmp.lt.s32.totalorder %v452, 0
        %v461 = vsub.s32 0, %v452
        %v462 = vsel %vm460, %v461, %v452
        %v463 = vshrl.u32 %v462, 4
        %v464 = vand.u32 %v462, 15
        %v465 = vsub.s32 0, %v464
        %v466 = vsel %vm460, %v465, %v464
        %vm467 = vcmp.ne.s32.totalorder %v459, 0
        %vm468 = vcmp.ne.s32.totalorder %v466, 0
        %vm469 = vcmp.lt.s32.totalorder %v459, 0
        %vm470 = vcmp.lt.s32.totalorder %v466, 0
        %vm471 = vmand %vm469, %vm467
        %vm472 = vmand %vm470, %vm468
        %v473 = vadd.s32 %v459, 16
        %v474 = vadd.s32 %v466, 16
        %v475 = vsel %vm471, %v473, %v459
        %v476 = vsel %vm472, %v474, %v466
        %vm477 = vcmp.eq.s32.totalorder %v475, 0
        %vm478 = vcmp.eq.s32.totalorder %v476, 0
        %v480 = vrot.slane %v440, 7
        %vm483 = vcmask 1040384
        %v484 = vrot.slane %v439, 7
        %v485 = vsel %vm483, %v484, %v480
        %v488 = vsel %vm483, %v480, %v484
        %v489 = vsel %vm477, 1, 0
        %v490 = vsel %vm478, 1, 0
        %vm491 = vcmp.eq.s32.totalorder %v489, 1
        %vm492 = vcmp.eq.s32.totalorder %v490, 1
        %v493 = vsel %vm491, 0.0, %v488
        %v494 = vsel %vm492, 0.0, %v485
        %v495 = vpack.c.bf16 %v494, %v493
        %vm496 = vcmp.eq.s32.totalorder %v475, 15
        %vm497 = vcmp.eq.s32.totalorder %v476, 15
        %vm498 = vcmask 1046528
        %v499 = vrot.slane %v439, 1
        %v500 = vrot.slane %v440, 1
        %v501 = vsel %vm498, %v499, %v500
        %v505 = vsel %vm498, %v500, %v499
        %v506 = vsel %vm496, 1, 0
        %v507 = vsel %vm497, 1, 0
        %vm508 = vcmp.eq.s32.totalorder %v506, 1
        %vm509 = vcmp.eq.s32.totalorder %v507, 1
        %v510 = vsel %vm508, 0.0, %v501
        %v511 = vsel %vm509, 0.0, %v505
        %v512 = vpack.c.bf16 %v511, %v510
        %v513 = vpack.c.bf16 %v440, %v439
        %v514 = vld [vmem:[#allocation5] sm:$0xf]
        %v515 = vld [vmem:[#allocation5 + $0x4] sm:$0xf]
        %v516 = vld [vmem:[#allocation5 + $0x8] sm:$0xf]
        %v517 = vld [vmem:[#allocation5 + $0xc] sm:$0xf]
        %v518 = vld [vmem:[#allocation5 + $0x10] sm:$0xf]
        %v519 = vld [vmem:[#allocation5 + $0x14] sm:$0xf]
        %v520 = vld [vmem:[#allocation5 + $0x18] sm:$0xf]
        %v521 = vld [vmem:[#allocation5 + $0x1c] sm:$0xf]
        %v522 = vld [vmem:[#allocation5 + $0x20] sm:$0xf]
        %v523 = vld [vmem:[#allocation5 + $0x24] sm:$0xf]
        %v524 = vld [vmem:[#allocation5 + $0x28] sm:$0xf]
        %v525 = vld [vmem:[#allocation5 + $0x2c] sm:$0xf]
        %v526 = vld [vmem:[#allocation5 + $0x30] sm:$0xf]
        %v527 = vld [vmem:[#allocation5 + $0x34] sm:$0xf]
        %v528 = vld [vmem:[#allocation5 + $0x38] sm:$0xf]
        %v529 = vld [vmem:[#allocation5 + $0x3c] sm:$0xf]
        %s530 = scalar_lea.vmem [#allocation5], 64
        %v531 = vld [vmem:[%s530] sm:$0xf]
        %v532 = vld [vmem:[%s530 + $0x4] sm:$0xf]
        %v533 = vld [vmem:[%s530 + $0x8] sm:$0xf]
        %v534 = vld [vmem:[%s530 + $0xc] sm:$0xf]
        %v535 = vld [vmem:[%s530 + $0x10] sm:$0xf]
        %v536 = vld [vmem:[%s530 + $0x14] sm:$0xf]
        %v537 = vld [vmem:[%s530 + $0x18] sm:$0xf]
        %v538 = vld [vmem:[%s530 + $0x1c] sm:$0xf]
        %v539 = vld [vmem:[%s530 + $0x20] sm:$0xf]
        %v540 = vld [vmem:[%s530 + $0x24] sm:$0xf]
        %v541 = vld [vmem:[%s530 + $0x28] sm:$0xf]
        %v542 = vld [vmem:[%s530 + $0x2c] sm:$0xf]
        %v543 = vld [vmem:[%s530 + $0x30] sm:$0xf]
        %v544 = vld [vmem:[%s530 + $0x34] sm:$0xf]
        %v545 = vld [vmem:[%s530 + $0x38] sm:$0xf]
        %v546 = vld [vmem:[%s530 + $0x3c] sm:$0xf]
        %v563 = vunpack.c.l.b16 %v531
        %v564 = vunpack.c.l.b16 %v532
        %v565 = vunpack.c.l.b16 %v533
        %v566 = vunpack.c.l.b16 %v534
        %v567 = vunpack.c.l.b16 %v535
        %v568 = vunpack.c.l.b16 %v536
        %v569 = vunpack.c.l.b16 %v537
        %v570 = vunpack.c.l.b16 %v538
        %v571 = vunpack.c.l.b16 %v539
        %v572 = vunpack.c.l.b16 %v540
        %v573 = vunpack.c.l.b16 %v541
        %v574 = vunpack.c.l.b16 %v542
        %v575 = vunpack.c.l.b16 %v543
        %v576 = vunpack.c.l.b16 %v544
        %v577 = vunpack.c.l.b16 %v545
        %v578 = vunpack.c.l.b16 %v546
        %v579 = vpack.c.b16 %v564, %v563
        %v580 = vpack.c.b16 %v566, %v565
        %v581 = vpack.c.b16 %v568, %v567
        %v582 = vpack.c.b16 %v570, %v569
        %v583 = vpack.c.b16 %v572, %v571
        %v584 = vpack.c.b16 %v574, %v573
        %v585 = vpack.c.b16 %v576, %v575
        %v586 = vpack.c.b16 %v578, %v577
        %595 = vmatprep.subr.bf16.mxu0 0
        %596 = vmatpush1.bf16.msra.mxu0 %v579
        %597 = vmatprep.subr.bf16.mxu0 0
        %598 = vmatpush1.bf16.msra.mxu0 %v580
        %599 = vmatprep.subr.bf16.mxu0 0
        %600 = vmatpush1.bf16.msra.mxu0 %v581
        %601 = vmatprep.subr.bf16.mxu0 0
        %602 = vmatpush1.bf16.msra.mxu0 %v582
        %603 = vmatprep.subr.bf16.mxu0 0
        %604 = vmatpush1.bf16.msra.mxu0 %v583
        %605 = vmatprep.subr.bf16.mxu0 0
        %606 = vmatpush1.bf16.msra.mxu0 %v584
        %607 = vmatprep.subr.bf16.mxu0 0
        %608 = vmatpush1.bf16.msra.mxu0 %v585
        %609 = vmatprep.subr.bf16.mxu0 0
        %610 = vmatpush1.bf16.msra.mxu0 %v586
        %611 = vmatprep.subr.bf16.mxu0 0
        %612 = vmatpush1.bf16.msra.mxu0 0
        %613 = vmatprep.subr.bf16.mxu0 0
        %614 = vmatpush1.bf16.msra.mxu0 0
        %615 = vmatprep.subr.bf16.mxu0 0
        %616 = vmatpush1.bf16.msra.mxu0 0
        %617 = vmatprep.subr.bf16.mxu0 0
        %618 = vmatpush1.bf16.msra.mxu0 0
        %619 = vmatprep.subr.bf16.mxu0 0
        %620 = vmatpush1.bf16.msra.mxu0 0
        %621 = vmatprep.subr.bf16.mxu0 0
        %622 = vmatpush1.bf16.msra.mxu0 0
        %623 = vmatprep.subr.bf16.mxu0 0
        %624 = vmatpush1.bf16.msra.mxu0 0
        %625 = vmatprep.subr.bf16.mxu0 0
        %626 = vmatpush1.bf16.msra.mxu0 0
        %627 = vmatprep.mubr.bf16.mxu0 0
        %628 = vmatmul.mubr.bf16.gmra.mrb[0].mxu0 %v513
        %v629 = vpop.f32.mrb[0].mxu0
        %v630 = vadd.f32 0.0, %v629
        %v631 = vpop.f32.mrb[0].mxu0
        %v632 = vpop.f32.mrb[0].mxu0
        %v633 = vadd.f32 0.0, %v632
        %v634 = vpop.f32.mrb[0].mxu0
        %635 = vdwg.mxu0
        %v652 = vunpack.c.l.b16 %v514
        %v653 = vunpack.c.l.b16 %v515
        %v654 = vunpack.c.l.b16 %v516
        %v655 = vunpack.c.l.b16 %v517
        %v656 = vunpack.c.l.b16 %v518
        %v657 = vunpack.c.l.b16 %v519
        %v658 = vunpack.c.l.b16 %v520
        %v659 = vunpack.c.l.b16 %v521
        %v660 = vunpack.c.l.b16 %v522
        %v661 = vunpack.c.l.b16 %v523
        %v662 = vunpack.c.l.b16 %v524
        %v663 = vunpack.c.l.b16 %v525
        %v664 = vunpack.c.l.b16 %v526
        %v665 = vunpack.c.l.b16 %v527
        %v666 = vunpack.c.l.b16 %v528
        %v667 = vunpack.c.l.b16 %v529
        %v668 = vpack.c.b16 %v653, %v652
        %v669 = vpack.c.b16 %v655, %v654
        %v670 = vpack.c.b16 %v657, %v656
        %v671 = vpack.c.b16 %v659, %v658
        %v672 = vpack.c.b16 %v661, %v660
        %v673 = vpack.c.b16 %v663, %v662
        %v674 = vpack.c.b16 %v665, %v664
        %v675 = vpack.c.b16 %v667, %v666
        %684 = vmatprep.subr.bf16.mxu0 0
        %685 = vmatpush1.bf16.msra.mxu0 %v668
        %686 = vmatprep.subr.bf16.mxu0 0
        %687 = vmatpush1.bf16.msra.mxu0 %v669
        %688 = vmatprep.subr.bf16.mxu0 0
        %689 = vmatpush1.bf16.msra.mxu0 %v670
        %690 = vmatprep.subr.bf16.mxu0 0
        %691 = vmatpush1.bf16.msra.mxu0 %v671
        %692 = vmatprep.subr.bf16.mxu0 0
        %693 = vmatpush1.bf16.msra.mxu0 %v672
        %694 = vmatprep.subr.bf16.mxu0 0
        %695 = vmatpush1.bf16.msra.mxu0 %v673
        %696 = vmatprep.subr.bf16.mxu0 0
        %697 = vmatpush1.bf16.msra.mxu0 %v674
        %698 = vmatprep.subr.bf16.mxu0 0
        %699 = vmatpush1.bf16.msra.mxu0 %v675
        %700 = vmatprep.subr.bf16.mxu0 0
        %701 = vmatpush1.bf16.msra.mxu0 0
        %702 = vmatprep.subr.bf16.mxu0 0
        %703 = vmatpush1.bf16.msra.mxu0 0
        %704 = vmatprep.subr.bf16.mxu0 0
        %705 = vmatpush1.bf16.msra.mxu0 0
        %706 = vmatprep.subr.bf16.mxu0 0
        %707 = vmatpush1.bf16.msra.mxu0 0
        %708 = vmatprep.subr.bf16.mxu0 0
        %709 = vmatpush1.bf16.msra.mxu0 0
        %710 = vmatprep.subr.bf16.mxu0 0
        %711 = vmatpush1.bf16.msra.mxu0 0
        %712 = vmatprep.subr.bf16.mxu0 0
        %713 = vmatpush1.bf16.msra.mxu0 0
        %714 = vmatprep.subr.bf16.mxu0 0
        %715 = vmatpush1.bf16.msra.mxu0 0
        %716 = vmatprep.mubr.bf16.mxu0 0
        %717 = vmatmul.mubr.bf16.gmra.mrb[0].mxu0 %v495
        %v718 = vpop.f32.mrb[0].mxu0
        %v719 = vadd.f32 %v630, %v718
        %v720 = vpop.f32.mrb[0].mxu0
        %v721 = vpop.f32.mrb[0].mxu0
        %v722 = vadd.f32 %v633, %v721
        %v723 = vpop.f32.mrb[0].mxu0
        %724 = vdwg.mxu0
        %s725 = scalar_lea.vmem [#allocation5], 128
        %v726 = vld [vmem:[%s725] sm:$0xf]
        %v727 = vld [vmem:[%s725 + $0x4] sm:$0xf]
        %v728 = vld [vmem:[%s725 + $0x8] sm:$0xf]
        %v729 = vld [vmem:[%s725 + $0xc] sm:$0xf]
        %v730 = vld [vmem:[%s725 + $0x10] sm:$0xf]
        %v731 = vld [vmem:[%s725 + $0x14] sm:$0xf]
        %v732 = vld [vmem:[%s725 + $0x18] sm:$0xf]
        %v733 = vld [vmem:[%s725 + $0x1c] sm:$0xf]
        %v734 = vld [vmem:[%s725 + $0x20] sm:$0xf]
        %v735 = vld [vmem:[%s725 + $0x24] sm:$0xf]
        %v736 = vld [vmem:[%s725 + $0x28] sm:$0xf]
        %v737 = vld [vmem:[%s725 + $0x2c] sm:$0xf]
        %v738 = vld [vmem:[%s725 + $0x30] sm:$0xf]
        %v739 = vld [vmem:[%s725 + $0x34] sm:$0xf]
        %v740 = vld [vmem:[%s725 + $0x38] sm:$0xf]
        %v741 = vld [vmem:[%s725 + $0x3c] sm:$0xf]
        %v758 = vunpack.c.l.b16 %v726
        %v759 = vunpack.c.l.b16 %v727
        %v760 = vunpack.c.l.b16 %v728
        %v761 = vunpack.c.l.b16 %v729
        %v762 = vunpack.c.l.b16 %v730
        %v763 = vunpack.c.l.b16 %v731
        %v764 = vunpack.c.l.b16 %v732
        %v765 = vunpack.c.l.b16 %v733
        %v766 = vunpack.c.l.b16 %v734
        %v767 = vunpack.c.l.b16 %v735
        %v768 = vunpack.c.l.b16 %v736
        %v769 = vunpack.c.l.b16 %v737
        %v770 = vunpack.c.l.b16 %v738
        %v771 = vunpack.c.l.b16 %v739
        %v772 = vunpack.c.l.b16 %v740
        %v773 = vunpack.c.l.b16 %v741
        %v774 = vpack.c.b16 %v759, %v758
        %v775 = vpack.c.b16 %v761, %v760
        %v776 = vpack.c.b16 %v763, %v762
        %v777 = vpack.c.b16 %v765, %v764
        %v778 = vpack.c.b16 %v767, %v766
        %v779 = vpack.c.b16 %v769, %v768
        %v780 = vpack.c.b16 %v771, %v770
        %v781 = vpack.c.b16 %v773, %v772
        %790 = vmatprep.subr.bf16.mxu0 0
        %791 = vmatpush1.bf16.msra.mxu0 %v774
        %792 = vmatprep.subr.bf16.mxu0 0
        %793 = vmatpush1.bf16.msra.mxu0 %v775
        %794 = vmatprep.subr.bf16.mxu0 0
        %795 = vmatpush1.bf16.msra.mxu0 %v776
        %796 = vmatprep.subr.bf16.mxu0 0
        %797 = vmatpush1.bf16.msra.mxu0 %v777
        %798 = vmatprep.subr.bf16.mxu0 0
        %799 = vmatpush1.bf16.msra.mxu0 %v778
        %800 = vmatprep.subr.bf16.mxu0 0
        %801 = vmatpush1.bf16.msra.mxu0 %v779
        %802 = vmatprep.subr.bf16.mxu0 0
        %803 = vmatpush1.bf16.msra.mxu0 %v780
        %804 = vmatprep.subr.bf16.mxu0 0
        %805 = vmatpush1.bf16.msra.mxu0 %v781
        %806 = vmatprep.subr.bf16.mxu0 0
        %807 = vmatpush1.bf16.msra.mxu0 0
        %808 = vmatprep.subr.bf16.mxu0 0
        %809 = vmatpush1.bf16.msra.mxu0 0
        %810 = vmatprep.subr.bf16.mxu0 0
        %811 = vmatpush1.bf16.msra.mxu0 0
        %812 = vmatprep.subr.bf16.mxu0 0
        %813 = vmatpush1.bf16.msra.mxu0 0
        %814 = vmatprep.subr.bf16.mxu0 0
        %815 = vmatpush1.bf16.msra.mxu0 0
        %816 = vmatprep.subr.bf16.mxu0 0
        %817 = vmatpush1.bf16.msra.mxu0 0
        %818 = vmatprep.subr.bf16.mxu0 0
        %819 = vmatpush1.bf16.msra.mxu0 0
        %820 = vmatprep.subr.bf16.mxu0 0
        %821 = vmatpush1.bf16.msra.mxu0 0
        %822 = vmatprep.mubr.bf16.mxu0 0
        %823 = vmatmul.mubr.bf16.gmra.mrb[0].mxu0 %v512
        %v824 = vpop.f32.mrb[0].mxu0
        %v825 = vadd.f32 0.0, %v824
        %v826 = vpop.f32.mrb[0].mxu0
        %v827 = vpop.f32.mrb[0].mxu0
        %v828 = vadd.f32 0.0, %v827
        %v829 = vpop.f32.mrb[0].mxu0
        %830 = vdwg.mxu0
        %v831 = vadd.f32 %v719, %v825
        %v832 = vadd.f32 %v722, %v828
        %v833 = vld [vmem:[#allocation7] sm:$0x1]
        %v835 = vlaneseq
        %v836 = vshrl.u32 %v835, 7
        %v837 = vsub.s32 0, %v836
        %v838 = vrot.slane %v833, %v837
        %v840 = vadd.f32 %v831, %v838
        %v841 = vadd.f32 %v832, %v838
        %v842 = vmul.f32 %v840, 0.01
        %v843 = vmul.f32 %v841, 0.01
        %v844 = vmax.f32 %v840, %v842
        %v845 = vmax.f32 %v841, %v843
        %v846 = vpack.c.bf16 %v845, %v844
        %v847 = vld [vmem:[%s6] sm:$0xf]
        %v848 = vld [vmem:[%s6 + $0x4] sm:$0xf]
        %v849 = vld [vmem:[%s6 + $0x8] sm:$0xf]
        %v850 = vld [vmem:[%s6 + $0xc] sm:$0xf]
        %v851 = vld [vmem:[%s6 + $0x10] sm:$0xf]
        %v852 = vld [vmem:[%s6 + $0x14] sm:$0xf]
        %v853 = vld [vmem:[%s6 + $0x18] sm:$0xf]
        %v854 = vld [vmem:[%s6 + $0x1c] sm:$0xf]
        %v855 = vld [vmem:[%s6 + $0x20] sm:$0xf]
        %v856 = vld [vmem:[%s6 + $0x24] sm:$0xf]
        %v857 = vld [vmem:[%s6 + $0x28] sm:$0xf]
        %v858 = vld [vmem:[%s6 + $0x2c] sm:$0xf]
        %v859 = vld [vmem:[%s6 + $0x30] sm:$0xf]
        %v860 = vld [vmem:[%s6 + $0x34] sm:$0xf]
        %v861 = vld [vmem:[%s6 + $0x38] sm:$0xf]
        %v862 = vld [vmem:[%s6 + $0x3c] sm:$0xf]
        %v863 = vld [vmem:[#allocation8] sm:$0x1]
        %v865 = vlaneseq
        %v866 = vshrl.u32 %v865, 7
        %v867 = vsub.s32 0, %v866
        %v868 = vrot.slane %v863, %v867
        %v886 = vunpack.c.l.b16 %v847
        %v887 = vunpack.c.l.b16 %v848
        %v888 = vunpack.c.l.b16 %v849
        %v889 = vunpack.c.l.b16 %v850
        %v890 = vunpack.c.l.b16 %v851
        %v891 = vunpack.c.l.b16 %v852
        %v892 = vunpack.c.l.b16 %v853
        %v893 = vunpack.c.l.b16 %v854
        %v894 = vunpack.c.l.b16 %v855
        %v895 = vunpack.c.l.b16 %v856
        %v896 = vunpack.c.l.b16 %v857
        %v897 = vunpack.c.l.b16 %v858
        %v898 = vunpack.c.l.b16 %v859
        %v899 = vunpack.c.l.b16 %v860
        %v900 = vunpack.c.l.b16 %v861
        %v901 = vunpack.c.l.b16 %v862
        %v902 = vpack.c.b16 %v887, %v886
        %v903 = vpack.c.b16 %v889, %v888
        %v904 = vpack.c.b16 %v891, %v890
        %v905 = vpack.c.b16 %v893, %v892
        %v906 = vpack.c.b16 %v895, %v894
        %v907 = vpack.c.b16 %v897, %v896
        %v908 = vpack.c.b16 %v899, %v898
        %v909 = vpack.c.b16 %v901, %v900
        %918 = vmatprep.subr.bf16.mxu0 0
        %919 = vmatpush1.bf16.msra.mxu0 %v902
        %920 = vmatprep.subr.bf16.mxu0 0
        %921 = vmatpush1.bf16.msra.mxu0 %v903
        %922 = vmatprep.subr.bf16.mxu0 0
        %923 = vmatpush1.bf16.msra.mxu0 %v904
        %924 = vmatprep.subr.bf16.mxu0 0
        %925 = vmatpush1.bf16.msra.mxu0 %v905
        %926 = vmatprep.subr.bf16.mxu0 0
        %927 = vmatpush1.bf16.msra.mxu0 %v906
        %928 = vmatprep.subr.bf16.mxu0 0
        %929 = vmatpush1.bf16.msra.mxu0 %v907
        %930 = vmatprep.subr.bf16.mxu0 0
        %931 = vmatpush1.bf16.msra.mxu0 %v908
        %932 = vmatprep.subr.bf16.mxu0 0
        %933 = vmatpush1.bf16.msra.mxu0 %v909
        %934 = vmatprep.subr.bf16.mxu0 0
        %935 = vmatpush1.bf16.msra.mxu0 0
        %936 = vmatprep.subr.bf16.mxu0 0
        %937 = vmatpush1.bf16.msra.mxu0 0
        %938 = vmatprep.subr.bf16.mxu0 0
        %939 = vmatpush1.bf16.msra.mxu0 0
        %940 = vmatprep.subr.bf16.mxu0 0
        %941 = vmatpush1.bf16.msra.mxu0 0
        %942 = vmatprep.subr.bf16.mxu0 0
        %943 = vmatpush1.bf16.msra.mxu0 0
        %944 = vmatprep.subr.bf16.mxu0 0
        %945 = vmatpush1.bf16.msra.mxu0 0
        %946 = vmatprep.subr.bf16.mxu0 0
        %947 = vmatpush1.bf16.msra.mxu0 0
        %948 = vmatprep.subr.bf16.mxu0 0
        %949 = vmatpush1.bf16.msra.mxu0 0
        %950 = vmatprep.mubr.bf16.mxu0 0
        %951 = vmatmul.mubr.bf16.gmra.mrb[0].mxu0 %v846
        %v952 = vpop.f32.mrb[0].mxu0
        %v953 = vadd.f32 %v868, %v952
        %v954 = vpop.f32.mrb[0].mxu0
        %v955 = vpop.f32.mrb[0].mxu0
        %v956 = vadd.f32 %v868, %v955
        %v957 = vpop.f32.mrb[0].mxu0
        %958 = vdwg.mxu0
        %v959 = vadd.f32 %v953, %v448
        %v960 = vadd.f32 %v956, %v449
        %v961 = vmul.f32 %v959, 0.01
        %v962 = vmul.f32 %v960, 0.01
        %v963 = vmax.f32 %v959, %v961
        %v964 = vmax.f32 %v960, %v962
        %965 = vst [vmem:[%s352] sm:$0xff] %v963
        %966 = vst [vmem:[%s352 + $0x8] sm:$0xff] %v964
        %s967 = sand.u32 %s206, 1
        %s968 = scalar_lea.sflag [#allocation4], %s967
        %s969 = sand.u32 %s206, 1
        %s970 = smul.addr %s969, 16
        %s971 = scalar_lea.vmem [#allocation10], %s970
        // Predicated region
        $region69: #{tenant_layer.1} parent=51 // pred_check
          %p972 = pneg %p216
        $region70: #{tenant_layer.1} parent=51 // pred_check_branch
          %974 = sbr.rel (%p972) target = $region72
        $region71: #{tenant_layer.1} parent=51 // pred_region
          %s975 = smul.u32 2, %s25
          %s977 = ssub.s32 256, 256
          %978 = vsyncadd %s968, %s977
          %s979 = smul.addr %s975, 128
          %s980 = scalar_lea.hbm %s8, %s979
          %s981 = sshll.u32 %s971, 4
          %s982 = int_to_ptr.vmem [resolvable:$true] %s981
          %987 = dma.vmem_to_hbm [thread:$0]  %s982, 256, %s980, %s968, 128, 128, 8
        $region72: #{tenant_layer.1} parent=51 // pred_fallthru
          _
      $region52: #{tenant_layer.1} parent=5 // pred_fallthru
        _
      %p988 = scmp.le.s32.totalorder 2, %s20
      // Predicated region
      $region73: #{tenant_layer.1} parent=5 // pred_check
        %p989 = pneg %p988
      $region74: #{tenant_layer.1} parent=5 // pred_check_branch
        %991 = sbr.rel (%p989) target = $region76
      $region75: #{tenant_layer.1} parent=5 // pred_region
        %s992 = ssub.s32 %s20, 2
        // Predicated region
        $region77: #{tenant_layer.1} parent=75 // pred_check
          %p993 = pneg %p222
        $region78: #{tenant_layer.1} parent=75 // pred_check_branch
          %995 = sbr.rel (%p993) target = $region80
        $region79: #{tenant_layer.1} parent=75 // pred_region
          %s996 = sand.u32 %s207, 1
          %s997 = scalar_lea.sflag [#allocation4], %s996
          %s998 = sand.u32 %s207, 1
          %s999 = smul.addr %s998, 16
          %s1000 = scalar_lea.vmem [#allocation10], %s999
          %1001 = dma.done %s997, 256
        $region80: #{tenant_layer.1} parent=75 // pred_fallthru
          _
      $region76: #{tenant_layer.1} parent=5 // pred_fallthru
        _
    $region6: #{tenant_layer.1} parent=1 // loop_footer
      %s24 = sadd.s32 1, %s20
    $region7: #{tenant_layer.1} parent=1 // loop_footer_branch
      %19 = sbr.rel target = $region3
    $region8: #{tenant_layer.1} parent=1 // loop_exit
      _
    %1002 = vsyncpa [#allocation3], 1
    %s1003 = scalar_lea.sflag [#allocation3], 1
    %1004 = vsyncpa %s1003, 1
    %1005 = vsyncpa [#allocation6], 1
    %1006 = vsyncpa [#allocation9], 1
    %1007 = vsyncpa [#allocation4], 1
    %s1008 = scalar_lea.sflag [#allocation4], 1
    %1009 = vsyncpa %s1008, 1

</llo_original>
